<compile_context>
chip_gen: v7x
topology: tpu7x:2x2x1
jax: 0.10.0
libtpu: 0.0.40
codegen_flags: <defaults>
</compile_context>

<pallas_src>
import functools
import math

import jax
import jax.numpy as jnp
from jax.experimental import pallas as pl
from jax.experimental.pallas import tpu as pltpu


def _round_up(x, m):
    return ((x + m - 1) // m) * m


def _cdiv(a, b):
    return (a + b - 1) // b


def _vmem_budget_bytes():
    """~85% of per-core physical VMEM; conservative 64 MiB (v7x per-TC) fallback."""
    cap = 64 * 1024 * 1024
    try:
        info = pltpu.get_tpu_info()
        c = int(getattr(info, "vmem_capacity_bytes", cap))
        if c > 0:
            cap = c
    except Exception:
        pass
    return int(cap * 0.85)


def pack_mlp_relu_params(w1, b1, w2, b2, *, compute_dtype=None, tm_hint=512,
                         lane_align=None, h_chunks=None):
    """One-time parameter packing for mlp_relu_forward (call at weight-load time).

    * pads C_in / H / C_out to MXU-friendly multiples,
    * transposes the nn.Linear weights to [K, N] layout (canonical MXU orientation),
    * optionally casts weights to a bf16 compute dtype (f32 accumulation kept),
    * picks the H chunking so resident weights + pipelined tiles fit the VMEM budget.
    """
    H, C_in = w1.shape
    C_out, H2 = w2.shape
    assert H2 == H and b1.shape == (H,) and b2.shape == (C_out,)

    w_dtype = jnp.dtype(compute_dtype) if compute_dtype is not None else jnp.dtype(w1.dtype)
    x_itemsize = jnp.dtype(w1.dtype).itemsize
    w_itemsize = w_dtype.itemsize
    if lane_align is None:
        # v6e/v7x MXUs are 256x256 for sub-32-bit operands; 128 is optimal for f32/v5e.
        lane_align = 256 if w_itemsize < 4 else 128

    C_in_p = _round_up(C_in, lane_align)
    C_out_p = _round_up(C_out, lane_align)
    H_p = _round_up(H, lane_align)

    budget = _vmem_budget_bytes()

    def vmem_estimate(TM, TH, n_h):
        wbuf = 1 if n_h == 1 else 2                          # resident vs pipelined weights
        act = 2 * TM * (C_in_p + C_out_p) * x_itemsize       # double-buffered x / out tiles
        wts = wbuf * (C_in_p * TH + TH * C_out_p + TH) * w_itemsize + C_out_p * 4
        scr = TM * C_out_p * 4 + TM * TH * (4 + w_itemsize)  # acc + f32 h + cast h
        return act + wts + scr

    if h_chunks is not None:
        n_h = max(1, int(h_chunks))
        TH = _round_up(_cdiv(H_p, n_h), lane_align)
    else:
        n_h = 1
        while True:
            TH = _round_up(_cdiv(H_p, n_h), lane_align)
            if TH <= lane_align or vmem_estimate(tm_hint, TH, n_h) <= budget:
                break
            n_h += 1
    H_pad = TH * n_h

    def pad2(a, r, c):
        if a.shape == (r, c):
            return a
        return jnp.pad(a, ((0, r - a.shape[0]), (0, c - a.shape[1])))

    w1_t = pad2(w1, H_pad, C_in_p).T.astype(w_dtype)               # [C_in_p, H_pad]
    w2_t = pad2(w2, C_out_p, H_pad).T.astype(w_dtype)              # [H_pad, C_out_p]
    b1_2d = jnp.pad(b1, (0, H_pad - H)).reshape(1, H_pad).astype(jnp.float32)
    b2_2d = jnp.pad(b2, (0, C_out_p - C_out)).reshape(1, C_out_p).astype(jnp.float32)

    return dict(w1=w1_t, b1=b1_2d, w2=w2_t, b2=b2_2d,
                C_in=C_in, C_out=C_out, C_in_p=C_in_p, C_out_p=C_out_p,
                H_pad=H_pad, TH=TH, n_h=n_h,
                tm_hint=tm_hint, vmem_budget=budget,
                x_itemsize=x_itemsize, w_itemsize=w_itemsize)


def _mlp_relu_kernel(x_ref, w1_ref, b1_ref, w2_ref, b2_ref, out_ref, *scratch, n_h):
    # x_ref : [TM, C_in_p]     pipelined row tile of tokens
    # w1_ref: [C_in_p, TH]     fc1 weight (pre-transposed, K-major)
    # b1_ref: [1, TH]          fc1 bias (f32)
    # w2_ref: [TH, C_out_p]    fc2 weight (pre-transposed)
    # b2_ref: [1, C_out_p]     fc2 bias (f32)
    # out_ref:[TM, C_out_p]
    # scratch: (acc_ref,) f32 [TM, C_out_p], only when the H axis is chunked.
    cdt = w1_ref.dtype
    x = x_ref[...].astype(cdt)

    # fc1 chunk: canonical [M,K] x [K,N] on the MXU, f32 accumulation.
    h = jax.lax.dot_general(
        x, w1_ref[...],
        dimension_numbers=(((1,), (0,)), ((), ())),
        preferred_element_type=jnp.float32)
    h = jnp.maximum(h + b1_ref[...], 0.0)          # bias + ReLU on the VPU
    # dropout (eval mode) -> identity

    # fc2 chunk: [M,K] x [K,N] partial product.
    y = jax.lax.dot_general(
        h.astype(cdt), w2_ref[...],
        dimension_numbers=(((1,), (0,)), ((), ())),
        preferred_element_type=jnp.float32)

    if n_h == 1:
        out_ref[...] = (y + b2_ref[...]).astype(out_ref.dtype)
    else:
        acc_ref = scratch[0]
        hi = pl.program_id(1)

        @pl.when(hi == 0)
        def _():
            acc_ref[...] = y

        @pl.when(hi > 0)
        def _():
            acc_ref[...] += y

        @pl.when(hi == n_h - 1)
        def _():
            out_ref[...] = (acc_ref[...] + b2_ref[...]).astype(out_ref.dtype)
    # dropout (eval mode) -> identity


def mlp_relu_forward(x, params, *, tm=None):
    """Fused fc1 -> ReLU -> (eval) dropout -> fc2 -> (eval) dropout.

    x: [..., C_in]; params: result of pack_mlp_relu_params. Returns [..., C_out].
    """
    C_in = params["C_in"]
    assert x.shape[-1] == C_in
    lead = x.shape[:-1]
    M = int(math.prod(lead)) if lead else 1

    C_in_p, C_out_p, C_out = params["C_in_p"], params["C_out_p"], params["C_out"]
    H_pad, TH, n_h = params["H_pad"], params["TH"], params["n_h"]
    w_itemsize = params["w_itemsize"]

    dtype = x.dtype
    itemsize = jnp.dtype(dtype).itemsize
    row_mult = 8 if itemsize >= 4 else 16

    if tm is None:
        tm = params["tm_hint"]
    TM = _round_up(min(tm, max(M, 1)), row_mult)
    # Guarantee >= 2 row tiles when M allows, so the "parallel" M axis can shard
    # across both TensorCores on v7x.
    if M > row_mult and _cdiv(M, TM) < 2:
        TM = _round_up(_cdiv(M, 2), row_mult)
    num_m = _cdiv(M, TM)
    M_p = num_m * TM

    x2d = x.reshape(M, C_in)
    if (M_p, C_in_p) != (M, C_in):
        x2d = jnp.pad(x2d, ((0, M_p - M), (0, C_in_p - C_in)))

    w1, b1, w2, b2 = params["w1"], params["b1"], params["w2"], params["b2"]

    x_spec = pl.BlockSpec((TM, C_in_p), lambda i, h: (i, 0))
    out_spec = pl.BlockSpec((TM, C_out_p), lambda i, h: (i, 0))
    resident = pl.BlockSpec(memory_space=pltpu.MemorySpace.VMEM)  # single-buffered, whole array
    if n_h == 1:
        # Weights fit: keep them fully VMEM-resident (one copy, no double-buffering).
        w1_spec = b1_spec = w2_spec = resident
    else:
        # Large-H fallback: stream weight chunks along the H reduction axis.
        w1_spec = pl.BlockSpec((C_in_p, TH), lambda i, h: (0, h))
        b1_spec = pl.BlockSpec((1, TH), lambda i, h: (0, h))
        w2_spec = pl.BlockSpec((TH, C_out_p), lambda i, h: (h, 0))
    b2_spec = resident

    scratch_shapes = []
    if n_h > 1:
        scratch_shapes.append(pltpu.VMEM((TM, C_out_p), jnp.float32))

    # VMEM limit sized from the actual footprint, capped at ~85% of physical VMEM.
    wbuf = 1 if n_h == 1 else 2
    est = (2 * TM * (C_in_p + C_out_p) * itemsize
           + wbuf * (C_in_p * TH + TH * C_out_p + TH) * w_itemsize
           + C_out_p * 4
           + (TM * C_out_p * 4 if n_h > 1 else 0)
           + TM * TH * (4 + w_itemsize))
    vmem_limit = int(min(params["vmem_budget"], max(32 * 1024 * 1024, int(est * 1.3))))

    cost = pl.CostEstimate(
        flops=2 * M_p * H_pad * (C_in_p + C_out_p),
        transcendentals=0,
        bytes_accessed=(M_p * (C_in_p + C_out_p) * itemsize
                        + (num_m if n_h > 1 else 1)
                        * (C_in_p * H_pad + H_pad * C_out_p) * w_itemsize),
    )

    out2d = pl.pallas_call(
        functools.partial(_mlp_relu_kernel, n_h=n_h),
        out_shape=jax.ShapeDtypeStruct((M_p, C_out_p), dtype),
        grid_spec=pltpu.PrefetchScalarGridSpec(
            num_scalar_prefetch=0,
            grid=(num_m, n_h),
            in_specs=[x_spec, w1_spec, b1_spec, w2_spec, b2_spec],
            out_specs=out_spec,
            scratch_shapes=scratch_shapes,
        ),
        compiler_params=pltpu.CompilerParams(
            dimension_semantics=("parallel", "arbitrary"),
            vmem_limit_bytes=vmem_limit,
        ),
        cost_estimate=cost,
    )(x2d, w1, b1, w2, b2)

    if (M_p, C_out_p) != (M, C_out):
        out2d = out2d[:M, :C_out]
    return out2d.reshape(*lead, C_out)


def reference_forward(x, w1, b1, w2, b2):
    """Pure-JAX reference mirroring the PyTorch module (dropout in eval mode)."""
    h = jnp.maximum(jnp.einsum("...c,hc->...h", x, w1) + b1, 0.0)
    return jnp.einsum("...h,oh->...o", h, w2) + b2


if __name__ == "__main__":
    # Small shapes consistent with Mlp_Relu(in_features, hidden_features, out_features, dropout)
    B, N = 2, 8
    in_features, hidden_features, out_features = 32, 64, 32

    key = jax.random.PRNGKey(0)
    kx, kw1, kb1, kw2, kb2 = jax.random.split(key, 5)

    x = jax.random.normal(kx, (B, N, in_features), dtype=jnp.float32)
    # nn.Linear layouts: fc1.weight [H, C_in], fc1.bias [H]; fc2.weight [C_out, H], fc2.bias [C_out]
    w1 = jax.random.normal(kw1, (hidden_features, in_features), dtype=jnp.float32) * 0.05
    b1 = jax.random.normal(kb1, (hidden_features,), dtype=jnp.float32) * 0.05
    w2 = jax.random.normal(kw2, (out_features, hidden_features), dtype=jnp.float32) * 0.05
    b2 = jax.random.normal(kb2, (out_features,), dtype=jnp.float32) * 0.05

    ref = reference_forward(x, w1, b1, w2, b2)

    # Pack once (pad + transpose + H-chunk planning); reuse for every forward call.
    params = pack_mlp_relu_params(w1, b1, w2, b2)
    out = jax.block_until_ready(mlp_relu_forward(x, params))
    assert out.shape == (B, N, out_features)
    assert jnp.allclose(out, ref, atol=1e-4, rtol=1e-4)

    # Small row tile to exercise the multi-tile pipelined grid path explicitly.
    out_tiled = jax.block_until_ready(mlp_relu_forward(x, params, tm=8))
    assert jnp.allclose(out_tiled, ref, atol=1e-4, rtol=1e-4)

    # Large-H fallback path: force the H reduction to be chunked (VMEM accumulator).
    params_chunked = pack_mlp_relu_params(w1, b1, w2, b2, h_chunks=2)
    out_chunked = jax.block_until_ready(mlp_relu_forward(x, params_chunked))
    assert jnp.allclose(out_chunked, ref, atol=1e-4, rtol=1e-4)

    # Opt-in bf16 compute path (f32 I/O, bf16 MXU operands, f32 accumulation).
    params_bf16 = pack_mlp_relu_params(w1, b1, w2, b2, compute_dtype=jnp.bfloat16)
    out_bf16 = jax.block_until_ready(mlp_relu_forward(x, params_bf16))
    assert out_bf16.shape == (B, N, out_features)
    assert float(jnp.max(jnp.abs(out_bf16 - ref))) < 0.05

    print("KERNEL_OK")
</pallas_src>

<mosaic_0001>
module attributes {stable_mosaic.version = 11 : i64} {
  func.func @_mlp_relu_kernel(%arg0: i32, %arg1: i32, %arg2: memref<8x128xf32, #tpu.memory_space<vmem>>, %arg3: memref<128x128xf32, #tpu.memory_space<vmem>>, %arg4: memref<1x128xf32, #tpu.memory_space<vmem>>, %arg5: memref<128x128xf32, #tpu.memory_space<vmem>>, %arg6: memref<1x128xf32, #tpu.memory_space<vmem>>, %arg7: memref<8x128xf32, #tpu.memory_space<vmem>>) attributes {dimension_semantics = [#tpu.dimension_semantics<parallel>, #tpu.dimension_semantics<arbitrary>], iteration_bounds = array<i64: 2, 1>, scalar_prefetch = 0 : i64, scratch_operands = 0 : i64, tpu.core_type = #tpu.core_type<tc>, window_params = [{transform_indices = @transform_0, window_bounds = array<i64: 8, 128>}, {pipeline_mode = #tpu.pipeline_mode<synchronous>, transform_indices = @transform_1, window_bounds = array<i64: 128, 128>}, {pipeline_mode = #tpu.pipeline_mode<synchronous>, transform_indices = @transform_2, window_bounds = array<i64: 1, 128>}, {pipeline_mode = #tpu.pipeline_mode<synchronous>, transform_indices = @transform_3, window_bounds = array<i64: 128, 128>}, {pipeline_mode = #tpu.pipeline_mode<synchronous>, transform_indices = @transform_4, window_bounds = array<i64: 1, 128>}, {transform_indices = @transform_5, window_bounds = array<i64: 8, 128>}]} {
    %c0 = arith.constant 0 : index
    %c0_0 = arith.constant 0 : index
    %0 = vector.load %arg2[%c0, %c0_0] : memref<8x128xf32, #tpu.memory_space<vmem>>, vector<8x128xf32>
    %c0_1 = arith.constant 0 : index
    %c0_2 = arith.constant 0 : index
    %1 = vector.load %arg3[%c0_1, %c0_2] : memref<128x128xf32, #tpu.memory_space<vmem>>, vector<128x128xf32>
    %cst = arith.constant dense<0.000000e+00> : vector<8x128xf32>
    %2 = tpu.matmul %0, %1, %cst {dimension_numbers = #tpu.dot_dimension_numbers<[1], [0], [0], [1], [0, 0, 1, 1], [], []>} : vector<8x128xf32>, vector<128x128xf32>, vector<8x128xf32> -> vector<8x128xf32>
    %c0_3 = arith.constant 0 : index
    %c0_4 = arith.constant 0 : index
    %3 = vector.load %arg4[%c0_3, %c0_4] : memref<1x128xf32, #tpu.memory_space<vmem>>, vector<1x128xf32>
    %4 = vector.broadcast %3 : vector<1x128xf32> to vector<8x128xf32>
    %5 = arith.addf %2, %4 : vector<8x128xf32>
    %cst_5 = arith.constant 0.000000e+00 : f32
    %6 = vector.broadcast %cst_5 : f32 to vector<8x128xf32>
    %7 = arith.maximumf %5, %6 : vector<8x128xf32>
    %c0_6 = arith.constant 0 : index
    %c0_7 = arith.constant 0 : index
    %8 = vector.load %arg5[%c0_6, %c0_7] : memref<128x128xf32, #tpu.memory_space<vmem>>, vector<128x128xf32>
    %cst_8 = arith.constant dense<0.000000e+00> : vector<8x128xf32>
    %9 = tpu.matmul %7, %8, %cst_8 {dimension_numbers = #tpu.dot_dimension_numbers<[1], [0], [0], [1], [0, 0, 1, 1], [], []>} : vector<8x128xf32>, vector<128x128xf32>, vector<8x128xf32> -> vector<8x128xf32>
    %c0_9 = arith.constant 0 : index
    %c0_10 = arith.constant 0 : index
    %10 = vector.load %arg6[%c0_9, %c0_10] : memref<1x128xf32, #tpu.memory_space<vmem>>, vector<1x128xf32>
    %11 = vector.broadcast %10 : vector<1x128xf32> to vector<8x128xf32>
    %12 = arith.addf %9, %11 : vector<8x128xf32>
    %c0_11 = arith.constant 0 : index
    %c0_12 = arith.constant 0 : index
    %13 = vector.load %arg7[%c0_11, %c0_12] : memref<8x128xf32, #tpu.memory_space<vmem>>, vector<8x128xf32>
    tpu.vector_store %arg7[%c0_11, %c0_12], %12 {strides = array<i32>} : memref<8x128xf32, #tpu.memory_space<vmem>>, vector<8x128xf32>,
    return
  }
  func.func @transform_0(%arg0: i32, %arg1: i32) -> (i32, i32) {
    %c0_i32 = arith.constant 0 : i32
    %c0_i32_0 = arith.constant 0 : i32
    return %arg0, %c0_i32 : i32, i32
  }
  func.func @transform_1(%arg0: i32, %arg1: i32) -> (i32, i32) {
    %c0_i32 = arith.constant 0 : i32
    %c0_i32_0 = arith.constant 0 : i32
    %c0_i32_1 = arith.constant 0 : i32
    return %c0_i32, %c0_i32_0 : i32, i32
  }
  func.func @transform_2(%arg0: i32, %arg1: i32) -> (i32, i32) {
    %c0_i32 = arith.constant 0 : i32
    %c0_i32_0 = arith.constant 0 : i32
    %c0_i32_1 = arith.constant 0 : i32
    return %c0_i32, %c0_i32_0 : i32, i32
  }
  func.func @transform_3(%arg0: i32, %arg1: i32) -> (i32, i32) {
    %c0_i32 = arith.constant 0 : i32
    %c0_i32_0 = arith.constant 0 : i32
    %c0_i32_1 = arith.constant 0 : i32
    return %c0_i32, %c0_i32_0 : i32, i32
  }
  func.func @transform_4(%arg0: i32, %arg1: i32) -> (i32, i32) {
    %c0_i32 = arith.constant 0 : i32
    %c0_i32_0 = arith.constant 0 : i32
    %c0_i32_1 = arith.constant 0 : i32
    return %c0_i32, %c0_i32_0 : i32, i32
  }
  func.func @transform_5(%arg0: i32, %arg1: i32) -> (i32, i32) {
    %c0_i32 = arith.constant 0 : i32
    %c0_i32_0 = arith.constant 0 : i32
    return %arg0, %c0_i32 : i32, i32
  }
}

</mosaic_0001>

<llo_original>
// kernel: tpu_custom_call.1
$region0: #{tpu_custom_call.1}
  #allocation0 [shape = 'u32[]', space=smem, size = 0x4, offset = 0x4, fixed_abs, tag = 'smem constant byte address 0x4 - core index']
  #allocation1 [shape = 'u32[144,128]{1,0:T(1,128)}', space=vmem, size = 0x12000, scoped, tag = 'internal scratch']
  %s0 = inlined_call_operand.hbm [shape: f32[16,128], index: 0, kind: input, shape index: {}]
  %s1 = inlined_call_operand.hbm [shape: f32[128,128], index: 1, kind: input, shape index: {}]
  %s2 = inlined_call_operand.vmem [shape: f32[1,128], index: 2, kind: input, shape index: {}]
  %s3 = inlined_call_operand.hbm [shape: f32[128,128], index: 3, kind: input, shape index: {}]
  %s4 = inlined_call_operand.vmem [shape: f32[1,128], index: 4, kind: input, shape index: {}]
  %s5 = inlined_call_operand.hbm [shape: f32[16,128], index: 5, kind: output, shape index: {}]
  %s6 = sld [smem:[#allocation0]]
  $region65: #{tpu_custom_call.1} parent=0
    _
  %s8 = ssub.s32 1, %s6
  %s9 = scalar_select 0, %s8, %s6
  $region1: #{tpu_custom_call.1} parent=0
    #allocation2 [shape = 'u8[8192]{0}', space=vmem, size = 0x2000, scoped, tag = 'input window, operand 0']
    #allocation3 [shape = 's32[2]{0}', space=sflag, size = 0x8, scoped, tag = 'scoped memory for tpu_custom_call.1']
    #allocation4 [shape = 's32[2]{0}', space=sflag, size = 0x8, scoped, tag = 'scoped memory for tpu_custom_call.1']
    #allocation5 [shape = 'u8[65536]{0}', space=vmem, size = 0x10000, scoped, tag = 'input window, operand 1, single buffered']
    #allocation6 [shape = 's32[1]{0}', space=sflag, size = 0x4, scoped, tag = 'scoped memory for tpu_custom_call.1']
    #allocation7 [shape = 'u8[65536]{0}', space=vmem, size = 0x10000, scoped, tag = 'input window, operand 3, single buffered']
    #allocation8 [shape = 'u8[8192]{0}', space=vmem, size = 0x2000, scoped, tag = 'output window, operand 0']
    %10 = vsyncpa [#allocation3], 0
    %s11 = scalar_lea.sflag [#allocation3], 1
    %12 = vsyncpa %s11, 0
    %13 = vsyncpa [#allocation6], 0
    %14 = vsyncpa [#allocation4], 0
    %s15 = scalar_lea.sflag [#allocation4], 1
    %16 = vsyncpa %s15, 0
    loop: start=0, step=1, limit=4
    $region2: #{tpu_custom_call.1} parent=1 // loop_pre_header
      _
    $region3: #{tpu_custom_call.1} parent=1 // loop_header
      %s18 = sphi 0, %s22
      %p19 = scmp.ge.s32.totalorder %s18, 4
      %s25 = sphi 0, %s37
      %s26 = sphi 0, %s33
      %s27 = sphi 0, %s25
      %s28 = sphi 0, %s26
      %s29 = sphi 0, %s27
      %s30 = sphi 0, %s28
      %s40 = sphi 0, %s42
      %s43 = sphi 0, %s40
      %s44 = sphi 0, %s43
      %s60 = sphi 0, %s44
      %s64 = sphi 0, %s64
      %s66 = sphi 0, %s64
      %s67 = sphi 0, %s66
      %s81 = sphi 0, %s67
      %s85 = sphi 0, %s85
      %s87 = sphi 0, %s85
      %s88 = sphi 0, %s87
      %s102 = sphi 0, %s88
      %s106 = sphi 0, %s106
      %s108 = sphi 0, %s106
      %s109 = sphi 0, %s108
      %s123 = sphi 0, %s109
      %s127 = sphi 0, %s127
      %s129 = sphi 0, %s127
      %s130 = sphi 0, %s129
      %s144 = sphi 0, %s130
      %s150 = sphi 0, %s152
      %s153 = sphi 0, %s150
      %s154 = sphi 0, %s153
      %s170 = sphi 0, %s154
    $region4: #{tpu_custom_call.1} parent=1 // loop_header_branch
      %21 = sbr.rel (%p19) target = $region8
    $region5: #{tpu_custom_call.1} parent=1 // loop_body
      %s23 = ssub.s32 %s18, 1
      %s24 = ssub.s32 %s18, 2
      %s31 = sadd.s32 1, %s26
      %p32 = scmp.ge.s32.totalorder %s31, 1
      %s33 = scalar_select %p32, 0, %s31
      %s34 = sadd.s32 1, %s25
      %s35 = scalar_select %p32, %s34, %s25
      %p36 = scmp.ge.s32.totalorder %s35, 2
      %s37 = scalar_select %p36, 0, %s35
      %s38 = ssub.s32 %s25, %s37
      %p39 = scmp.eq.s32.totalorder %s38, 0
      %s41 = sadd.s32 %s40, 1
      %s42 = scalar_select %p39, %s40, %s41
      %p45 = pneg %p39
      %p46 = scmp.eq.s32.totalorder %s18, 1
      %p47 = por %p45, %p46
      %p48 = scmp.ne.s32.totalorder %s40, %s43
      %p49 = scmp.eq.s32.totalorder %s18, 0
      %p50 = por %p48, %p49
      %p51 = scmp.ne.s32.totalorder %s40, %s43
      %p52 = scmp.eq.s32.totalorder %s23, 1
      %p53 = por %p51, %p52
      %p54 = scmp.ne.s32.totalorder %s43, %s44
      %p55 = scmp.eq.s32.totalorder %s23, 0
      %p56 = por %p54, %p55
      %p57 = scmp.ne.s32.totalorder %s43, %s44
      %p58 = scmp.eq.s32.totalorder %s24, 1
      %p59 = por %p57, %p58
      %p61 = scmp.ne.s32.totalorder %s44, %s60
      %p62 = scmp.eq.s32.totalorder %s24, 0
      %p63 = por %p61, %p62
      %s65 = sadd.s32 %s64, 1
      %p68 = scmp.eq.s32.totalorder %s18, 1
      %p69 = scmp.ne.s32.totalorder %s64, %s66
      %p70 = scmp.eq.s32.totalorder %s18, 0
      %p71 = por %p69, %p70
      %p72 = scmp.ne.s32.totalorder %s64, %s66
      %p73 = scmp.eq.s32.totalorder %s23, 1
      %p74 = por %p72, %p73
      %p75 = scmp.ne.s32.totalorder %s66, %s67
      %p76 = scmp.eq.s32.totalorder %s23, 0
      %p77 = por %p75, %p76
      %p78 = scmp.ne.s32.totalorder %s66, %s67
      %p79 = scmp.eq.s32.totalorder %s24, 1
      %p80 = por %p78, %p79
      %p82 = scmp.ne.s32.totalorder %s67, %s81
      %p83 = scmp.eq.s32.totalorder %s24, 0
      %p84 = por %p82, %p83
      %s86 = sadd.s32 %s85, 1
      %p89 = scmp.eq.s32.totalorder %s18, 1
      %p90 = scmp.ne.s32.totalorder %s85, %s87
      %p91 = scmp.eq.s32.totalorder %s18, 0
      %p92 = por %p90, %p91
      %p93 = scmp.ne.s32.totalorder %s85, %s87
      %p94 = scmp.eq.s32.totalorder %s23, 1
      %p95 = por %p93, %p94
      %p96 = scmp.ne.s32.totalorder %s87, %s88
      %p97 = scmp.eq.s32.totalorder %s23, 0
      %p98 = por %p96, %p97
      %p99 = scmp.ne.s32.totalorder %s87, %s88
      %p100 = scmp.eq.s32.totalorder %s24, 1
      %p101 = por %p99, %p100
      %p103 = scmp.ne.s32.totalorder %s88, %s102
      %p104 = scmp.eq.s32.totalorder %s24, 0
      %p105 = por %p103, %p104
      %s107 = sadd.s32 %s106, 1
      %p110 = scmp.eq.s32.totalorder %s18, 1
      %p111 = scmp.ne.s32.totalorder %s106, %s108
      %p112 = scmp.eq.s32.totalorder %s18, 0
      %p113 = por %p111, %p112
      %p114 = scmp.ne.s32.totalorder %s106, %s108
      %p115 = scmp.eq.s32.totalorder %s23, 1
      %p116 = por %p114, %p115
      %p117 = scmp.ne.s32.totalorder %s108, %s109
      %p118 = scmp.eq.s32.totalorder %s23, 0
      %p119 = por %p117, %p118
      %p120 = scmp.ne.s32.totalorder %s108, %s109
      %p121 = scmp.eq.s32.totalorder %s24, 1
      %p122 = por %p120, %p121
      %p124 = scmp.ne.s32.totalorder %s109, %s123
      %p125 = scmp.eq.s32.totalorder %s24, 0
      %p126 = por %p124, %p125
      %s128 = sadd.s32 %s127, 1
      %p131 = scmp.eq.s32.totalorder %s18, 1
      %p132 = scmp.ne.s32.totalorder %s127, %s129
      %p133 = scmp.eq.s32.totalorder %s18, 0
      %p134 = por %p132, %p133
      %p135 = scmp.ne.s32.totalorder %s127, %s129
      %p136 = scmp.eq.s32.totalorder %s23, 1
      %p137 = por %p135, %p136
      %p138 = scmp.ne.s32.totalorder %s129, %s130
      %p139 = scmp.eq.s32.totalorder %s23, 0
      %p140 = por %p138, %p139
      %p141 = scmp.ne.s32.totalorder %s129, %s130
      %p142 = scmp.eq.s32.totalorder %s24, 1
      %p143 = por %p141, %p142
      %p145 = scmp.ne.s32.totalorder %s130, %s144
      %p146 = scmp.eq.s32.totalorder %s24, 0
      %p147 = por %p145, %p146
      %s148 = ssub.s32 %s25, %s37
      %p149 = scmp.eq.s32.totalorder %s148, 0
      %s151 = sadd.s32 %s150, 1
      %s152 = scalar_select %p149, %s150, %s151
      %p155 = pneg %p149
      %p156 = scmp.eq.s32.totalorder %s18, 1
      %p157 = por %p155, %p156
      %p158 = scmp.ne.s32.totalorder %s150, %s153
      %p159 = scmp.eq.s32.totalorder %s18, 0
      %p160 = por %p158, %p159
      %p161 = scmp.ne.s32.totalorder %s150, %s153
      %p162 = scmp.eq.s32.totalorder %s23, 1
      %p163 = por %p161, %p162
      %p164 = scmp.ne.s32.totalorder %s153, %s154
      %p165 = scmp.eq.s32.totalorder %s23, 0
      %p166 = por %p164, %p165
      %p167 = scmp.ne.s32.totalorder %s153, %s154
      %p168 = scmp.eq.s32.totalorder %s24, 1
      %p169 = por %p167, %p168
      %p171 = scmp.ne.s32.totalorder %s154, %s170
      %p172 = scmp.eq.s32.totalorder %s24, 0
      %p173 = por %p171, %p172
      %p174 = scmp.le.s32.totalorder 1, %s18
      %p175 = scmp.lt.s32.totalorder %s18, 3
      %p176 = pnand %p174, %p175
      %p177 = pneg %p176
      // Predicated region
      $region9: #{tpu_custom_call.1} parent=5 // pred_check
        _
      $region10: #{tpu_custom_call.1} parent=5 // pred_check_branch
        %179 = sbr.rel (%p176) target = $region12
      $region11: #{tpu_custom_call.1} parent=5 // pred_region
        %s180 = ssub.s32 %s18, 1
        // Predicated region
        $region13: #{tpu_custom_call.1} parent=11 // pred_check
          %p181 = pneg %p77
        $region14: #{tpu_custom_call.1} parent=11 // pred_check_branch
          %183 = sbr.rel (%p181) target = $region16
        $region15: #{tpu_custom_call.1} parent=11 // pred_region
          %s185 = ssub.s32 2048, 2048
          %186 = vsyncadd [#allocation6], %s185
          %s187 = sshll.u32 [#allocation5], 4
          %s188 = int_to_ptr.vmem [resolvable:$true] %s187
          %193 = dma.hbm_to_vmem [thread:$0]  %s1, 2048, %s188, [#allocation6], 128, 128, 8
        $region16: #{tpu_custom_call.1} parent=11 // pred_fallthru
          _
        // Predicated region
        $region17: #{tpu_custom_call.1} parent=11 // pred_check
          %p194 = pneg %p98
        $region18: #{tpu_custom_call.1} parent=11 // pred_check_branch
          %196 = sbr.rel (%p194) target = $region20
        $region19: #{tpu_custom_call.1} parent=11 // pred_region
          _
        $region20: #{tpu_custom_call.1} parent=11 // pred_fallthru
          _
        // Predicated region
        $region21: #{tpu_custom_call.1} parent=11 // pred_check
          %p197 = pneg %p119
        $region22: #{tpu_custom_call.1} parent=11 // pred_check_branch
          %199 = sbr.rel (%p197) target = $region24
        $region23: #{tpu_custom_call.1} parent=11 // pred_region
          %s201 = ssub.s32 2048, 2048
          %202 = vsyncadd [#allocation6], %s201
          %s203 = sshll.u32 [#allocation7], 4
          %s204 = int_to_ptr.vmem [resolvable:$true] %s203
          %209 = dma.hbm_to_vmem [thread:$0]  %s3, 2048, %s204, [#allocation6], 128, 128, 8
        $region24: #{tpu_custom_call.1} parent=11 // pred_fallthru
          _
        // Predicated region
        $region25: #{tpu_custom_call.1} parent=11 // pred_check
          %p210 = pneg %p140
        $region26: #{tpu_custom_call.1} parent=11 // pred_check_branch
          %212 = sbr.rel (%p210) target = $region28
        $region27: #{tpu_custom_call.1} parent=11 // pred_region
          _
        $region28: #{tpu_custom_call.1} parent=11 // pred_fallthru
          _
      $region12: #{tpu_custom_call.1} parent=5 // pred_fallthru
        _
      %p213 = scmp.lt.s32.totalorder %s18, 2
      // Predicated region
      $region29: #{tpu_custom_call.1} parent=5 // pred_check
        %p214 = pneg %p213
      $region30: #{tpu_custom_call.1} parent=5 // pred_check_branch
        %216 = sbr.rel (%p214) target = $region32
      $region31: #{tpu_custom_call.1} parent=5 // pred_region
        // Predicated region
        $region33: #{tpu_custom_call.1} parent=31 // pred_check
          %p217 = pneg %p50
        $region34: #{tpu_custom_call.1} parent=31 // pred_check_branch
          %219 = sbr.rel (%p217) target = $region36
        $region35: #{tpu_custom_call.1} parent=31 // pred_region
          %s220 = sand.u32 %s40, 1
          %s221 = scalar_lea.sflag [#allocation3], %s220
          %s222 = sand.u32 %s40, 1
          %s223 = smul.addr %s222, 8
          %s224 = scalar_lea.vmem [#allocation2], %s223
          %s226 = ssub.s32 128, 128
          %227 = vsyncadd %s221, %s226
          %s228 = smul.addr %s25, 128
          %s229 = scalar_lea.hbm %s0, %s228
          %s231 = sshll.u32 %s224, 4
          %s232 = int_to_ptr.vmem [resolvable:$true] %s231
          %234 = dma.hbm_to_vmem [thread:$0]  %s229, 128, %s232, %s221
        $region36: #{tpu_custom_call.1} parent=31 // pred_fallthru
          _
      $region32: #{tpu_custom_call.1} parent=5 // pred_fallthru
        _
      %p235 = scmp.le.s32.totalorder 1, %s18
      %p236 = scmp.lt.s32.totalorder %s18, 3
      %p237 = pnand %p235, %p236
      %p238 = pneg %p237
      // Predicated region
      $region37: #{tpu_custom_call.1} parent=5 // pred_check
        _
      $region38: #{tpu_custom_call.1} parent=5 // pred_check_branch
        %240 = sbr.rel (%p237) target = $region40
      $region39: #{tpu_custom_call.1} parent=5 // pred_region
        %s241 = ssub.s32 %s18, 1
        %s242 = sand.u32 %s43, 1
        %s243 = scalar_lea.sflag [#allocation3], %s242
        %s244 = sand.u32 %s43, 1
        %s245 = smul.addr %s244, 8
        %s246 = scalar_lea.vmem [#allocation2], %s245
        // Predicated region
        $region41: #{tpu_custom_call.1} parent=39 // pred_check
          %p247 = pneg %p56
        $region42: #{tpu_custom_call.1} parent=39 // pred_check_branch
          %249 = sbr.rel (%p247) target = $region44
        $region43: #{tpu_custom_call.1} parent=39 // pred_region
          %250 = dma.done %s243, 128
        $region44: #{tpu_custom_call.1} parent=39 // pred_fallthru
          _
        // Predicated region
        $region45: #{tpu_custom_call.1} parent=39 // pred_check
          %p251 = pneg %p77
        $region46: #{tpu_custom_call.1} parent=39 // pred_check_branch
          %253 = sbr.rel (%p251) target = $region48
        $region47: #{tpu_custom_call.1} parent=39 // pred_region
          %254 = dma.done [#allocation6], 2048
        $region48: #{tpu_custom_call.1} parent=39 // pred_fallthru
          _
        // Predicated region
        $region49: #{tpu_custom_call.1} parent=39 // pred_check
          %p255 = pneg %p119
        $region50: #{tpu_custom_call.1} parent=39 // pred_check_branch
          %257 = sbr.rel (%p255) target = $region52
        $region51: #{tpu_custom_call.1} parent=39 // pred_region
          %258 = dma.done [#allocation6], 2048
        $region52: #{tpu_custom_call.1} parent=39 // pred_fallthru
          _
        %s259 = sand.u32 %s43, 1
        %s260 = scalar_lea.sflag [#allocation3], %s259
        %s261 = sand.u32 %s43, 1
        %s262 = smul.addr %s261, 8
        %s263 = scalar_lea.vmem [#allocation2], %s262
        %p264 = pneg %p56
        %p265 = pneg %p53
        %p266 = pneg %p77
        %p267 = pneg %p74
        %p268 = pneg %p98
        %p269 = pneg %p95
        %p270 = pneg %p119
        %p271 = pneg %p116
        %p272 = pneg %p140
        %p273 = pneg %p137
        %p274 = pneg %p166
        %p275 = pneg %p163
        %s276 = sand.u32 %s153, 1
        %s277 = scalar_lea.sflag [#allocation4], %s276
        %s278 = sand.u32 %s153, 1
        %s279 = smul.addr %s278, 8
        %s280 = scalar_lea.vmem [#allocation8], %s279
        %v281 = vld [vmem:[%s246] sm:$0xff]
        %v282 = vld [vmem:[#allocation5] sm:$0xff]
        %v283 = vld [vmem:[#allocation5 + $0x8] sm:$0xff]
        %v284 = vld [vmem:[#allocation5 + $0x10] sm:$0xff]
        %v285 = vld [vmem:[#allocation5 + $0x18] sm:$0xff]
        %v286 = vld [vmem:[#allocation5 + $0x20] sm:$0xff]
        %v287 = vld [vmem:[#allocation5 + $0x28] sm:$0xff]
        %v288 = vld [vmem:[#allocation5 + $0x30] sm:$0xff]
        %v289 = vld [vmem:[#allocation5 + $0x38] sm:$0xff]
        %v290 = vld [vmem:[#allocation5 + $0x40] sm:$0xff]
        %v291 = vld [vmem:[#allocation5 + $0x48] sm:$0xff]
        %v292 = vld [vmem:[#allocation5 + $0x50] sm:$0xff]
        %v293 = vld [vmem:[#allocation5 + $0x58] sm:$0xff]
        %v294 = vld [vmem:[#allocation5 + $0x60] sm:$0xff]
        %v295 = vld [vmem:[#allocation5 + $0x68] sm:$0xff]
        %v296 = vld [vmem:[#allocation5 + $0x70] sm:$0xff]
        %v297 = vld [vmem:[#allocation5 + $0x78] sm:$0xff]
        %v298 = vld [vmem:[%s2] sm:$0x1]
        %v300 = vlaneseq
        %v301 = vshrl.u32 %v300, 7
        %v302 = vsub.s32 0, %v301
        %v303 = vrot.slane %v298, %v302
        %305 = vmatprep.subr.mxu0 0.0
        %306 = vmatpush1.msra.mxu0 %v282
        %307 = vmatprep.subr.mxu0 0.0
        %308 = vmatpush1.msra.mxu0 %v283
        %309 = vmatprep.subr.mxu0 0.0
        %310 = vmatpush1.msra.mxu0 %v284
        %311 = vmatprep.subr.mxu0 0.0
        %312 = vmatpush1.msra.mxu0 %v285
        %313 = vmatprep.subr.mxu0 0.0
        %314 = vmatpush1.msra.mxu0 %v286
        %315 = vmatprep.subr.mxu0 0.0
        %316 = vmatpush1.msra.mxu0 %v287
        %317 = vmatprep.subr.mxu0 0.0
        %318 = vmatpush1.msra.mxu0 %v288
        %319 = vmatprep.subr.mxu0 0.0
        %320 = vmatpush1.msra.mxu0 %v289
        %321 = vmatprep.subr.mxu0 0.0
        %322 = vmatpush1.msra.mxu0 %v290
        %323 = vmatprep.subr.mxu0 0.0
        %324 = vmatpush1.msra.mxu0 %v291
        %325 = vmatprep.subr.mxu0 0.0
        %326 = vmatpush1.msra.mxu0 %v292
        %327 = vmatprep.subr.mxu0 0.0
        %328 = vmatpush1.msra.mxu0 %v293
        %329 = vmatprep.subr.mxu0 0.0
        %330 = vmatpush1.msra.mxu0 %v294
        %331 = vmatprep.subr.mxu0 0.0
        %332 = vmatpush1.msra.mxu0 %v295
        %333 = vmatprep.subr.mxu0 0.0
        %334 = vmatpush1.msra.mxu0 %v296
        %335 = vmatprep.subr.mxu0 0.0
        %336 = vmatpush1.msra.mxu0 %v297
        %337 = vmatprep.subr.mxu0 0.0
        %338 = vmatpush1.msra.mxu0 0.0
        %339 = vmatprep.subr.mxu0 0.0
        %340 = vmatpush1.msra.mxu0 0.0
        %341 = vmatprep.subr.mxu0 0.0
        %342 = vmatpush1.msra.mxu0 0.0
        %343 = vmatprep.subr.mxu0 0.0
        %344 = vmatpush1.msra.mxu0 0.0
        %345 = vmatprep.subr.mxu0 0.0
        %346 = vmatpush1.msra.mxu0 0.0
        %347 = vmatprep.subr.mxu0 0.0
        %348 = vmatpush1.msra.mxu0 0.0
        %349 = vmatprep.subr.mxu0 0.0
        %350 = vmatpush1.msra.mxu0 0.0
        %351 = vmatprep.subr.mxu0 0.0
        %352 = vmatpush1.msra.mxu0 0.0
        %353 = vmatprep.subr.mxu0 0.0
        %354 = vmatpush1.msra.mxu0 0.0
        %355 = vmatprep.subr.mxu0 0.0
        %356 = vmatpush1.msra.mxu0 0.0
        %357 = vmatprep.subr.mxu0 0.0
        %358 = vmatpush1.msra.mxu0 0.0
        %359 = vmatprep.subr.mxu0 0.0
        %360 = vmatpush1.msra.mxu0 0.0
        %361 = vmatprep.subr.mxu0 0.0
        %362 = vmatpush1.msra.mxu0 0.0
        %363 = vmatprep.subr.mxu0 0.0
        %364 = vmatpush1.msra.mxu0 0.0
        %365 = vmatprep.subr.mxu0 0.0
        %366 = vmatpush1.msra.mxu0 0.0
        %367 = vmatprep.subr.mxu0 0.0
        %368 = vmatpush1.msra.mxu0 0.0
        %369 = vmatprep.mubr.f32.mxu0 0.0
        %370 = vmatmul.mubr.f32.gmra.mrb[0].mxu0 %v281
        %v371 = vpop.f32.mrb[0].mxu0
        %v372 = vadd.f32 %v303, %v371
        %v373 = vpop.f32.mrb[0].mxu0
        %374 = vdwg.mxu0
        %v375 = vmax.f32 %v372, 0.0
        %v376 = vld [vmem:[#allocation7] sm:$0xff]
        %v377 = vld [vmem:[#allocation7 + $0x8] sm:$0xff]
        %v378 = vld [vmem:[#allocation7 + $0x10] sm:$0xff]
        %v379 = vld [vmem:[#allocation7 + $0x18] sm:$0xff]
        %v380 = vld [vmem:[#allocation7 + $0x20] sm:$0xff]
        %v381 = vld [vmem:[#allocation7 + $0x28] sm:$0xff]
        %v382 = vld [vmem:[#allocation7 + $0x30] sm:$0xff]
        %v383 = vld [vmem:[#allocation7 + $0x38] sm:$0xff]
        %v384 = vld [vmem:[#allocation7 + $0x40] sm:$0xff]
        %v385 = vld [vmem:[#allocation7 + $0x48] sm:$0xff]
        %v386 = vld [vmem:[#allocation7 + $0x50] sm:$0xff]
        %v387 = vld [vmem:[#allocation7 + $0x58] sm:$0xff]
        %v388 = vld [vmem:[#allocation7 + $0x60] sm:$0xff]
        %v389 = vld [vmem:[#allocation7 + $0x68] sm:$0xff]
        %v390 = vld [vmem:[#allocation7 + $0x70] sm:$0xff]
        %v391 = vld [vmem:[#allocation7 + $0x78] sm:$0xff]
        %v392 = vld [vmem:[%s4] sm:$0x1]
        %v394 = vlaneseq
        %v395 = vshrl.u32 %v394, 7
        %v396 = vsub.s32 0, %v395
        %v397 = vrot.slane %v392, %v396
        %399 = vmatprep.subr.mxu0 0.0
        %400 = vmatpush1.msra.mxu0 %v376
        %401 = vmatprep.subr.mxu0 0.0
        %402 = vmatpush1.msra.mxu0 %v377
        %403 = vmatprep.subr.mxu0 0.0
        %404 = vmatpush1.msra.mxu0 %v378
        %405 = vmatprep.subr.mxu0 0.0
        %406 = vmatpush1.msra.mxu0 %v379
        %407 = vmatprep.subr.mxu0 0.0
        %408 = vmatpush1.msra.mxu0 %v380
        %409 = vmatprep.subr.mxu0 0.0
        %410 = vmatpush1.msra.mxu0 %v381
        %411 = vmatprep.subr.mxu0 0.0
        %412 = vmatpush1.msra.mxu0 %v382
        %413 = vmatprep.subr.mxu0 0.0
        %414 = vmatpush1.msra.mxu0 %v383
        %415 = vmatprep.subr.mxu0 0.0
        %416 = vmatpush1.msra.mxu0 %v384
        %417 = vmatprep.subr.mxu0 0.0
        %418 = vmatpush1.msra.mxu0 %v385
        %419 = vmatprep.subr.mxu0 0.0
        %420 = vmatpush1.msra.mxu0 %v386
        %421 = vmatprep.subr.mxu0 0.0
        %422 = vmatpush1.msra.mxu0 %v387
        %423 = vmatprep.subr.mxu0 0.0
        %424 = vmatpush1.msra.mxu0 %v388
        %425 = vmatprep.subr.mxu0 0.0
        %426 = vmatpush1.msra.mxu0 %v389
        %427 = vmatprep.subr.mxu0 0.0
        %428 = vmatpush1.msra.mxu0 %v390
        %429 = vmatprep.subr.mxu0 0.0
        %430 = vmatpush1.msra.mxu0 %v391
        %431 = vmatprep.subr.mxu0 0.0
        %432 = vmatpush1.msra.mxu0 0.0
        %433 = vmatprep.subr.mxu0 0.0
        %434 = vmatpush1.msra.mxu0 0.0
        %435 = vmatprep.subr.mxu0 0.0
        %436 = vmatpush1.msra.mxu0 0.0
        %437 = vmatprep.subr.mxu0 0.0
        %438 = vmatpush1.msra.mxu0 0.0
        %439 = vmatprep.subr.mxu0 0.0
        %440 = vmatpush1.msra.mxu0 0.0
        %441 = vmatprep.subr.mxu0 0.0
        %442 = vmatpush1.msra.mxu0 0.0
        %443 = vmatprep.subr.mxu0 0.0
        %444 = vmatpush1.msra.mxu0 0.0
        %445 = vmatprep.subr.mxu0 0.0
        %446 = vmatpush1.msra.mxu0 0.0
        %447 = vmatprep.subr.mxu0 0.0
        %448 = vmatpush1.msra.mxu0 0.0
        %449 = vmatprep.subr.mxu0 0.0
        %450 = vmatpush1.msra.mxu0 0.0
        %451 = vmatprep.subr.mxu0 0.0
        %452 = vmatpush1.msra.mxu0 0.0
        %453 = vmatprep.subr.mxu0 0.0
        %454 = vmatpush1.msra.mxu0 0.0
        %455 = vmatprep.subr.mxu0 0.0
        %456 = vmatpush1.msra.mxu0 0.0
        %457 = vmatprep.subr.mxu0 0.0
        %458 = vmatpush1.msra.mxu0 0.0
        %459 = vmatprep.subr.mxu0 0.0
        %460 = vmatpush1.msra.mxu0 0.0
        %461 = vmatprep.subr.mxu0 0.0
        %462 = vmatpush1.msra.mxu0 0.0
        %463 = vmatprep.mubr.f32.mxu0 0.0
        %464 = vmatmul.mubr.f32.gmra.mrb[0].mxu0 %v375
        %v465 = vpop.f32.mrb[0].mxu0
        %v466 = vadd.f32 %v397, %v465
        %v467 = vpop.f32.mrb[0].mxu0
        %468 = vdwg.mxu0
        %469 = vst [vmem:[%s280] sm:$0xff] %v466
        %s470 = sand.u32 %s153, 1
        %s471 = scalar_lea.sflag [#allocation4], %s470
        %s472 = sand.u32 %s153, 1
        %s473 = smul.addr %s472, 8
        %s474 = scalar_lea.vmem [#allocation8], %s473
        // Predicated region
        $region53: #{tpu_custom_call.1} parent=39 // pred_check
          %p475 = pneg %p163
        $region54: #{tpu_custom_call.1} parent=39 // pred_check_branch
          %477 = sbr.rel (%p475) target = $region56
        $region55: #{tpu_custom_call.1} parent=39 // pred_region
          %s479 = ssub.s32 128, 128
          %480 = vsyncadd %s471, %s479
          %s481 = smul.addr %s27, 128
          %s482 = scalar_lea.hbm %s5, %s481
          %s484 = sshll.u32 %s474, 4
          %s485 = int_to_ptr.vmem [resolvable:$true] %s484
          %487 = dma.vmem_to_hbm [thread:$0]  %s485, 128, %s482, %s471
        $region56: #{tpu_custom_call.1} parent=39 // pred_fallthru
          _
      $region40: #{tpu_custom_call.1} parent=5 // pred_fallthru
        _
      %p488 = scmp.le.s32.totalorder 2, %s18
      // Predicated region
      $region57: #{tpu_custom_call.1} parent=5 // pred_check
        %p489 = pneg %p488
      $region58: #{tpu_custom_call.1} parent=5 // pred_check_branch
        %491 = sbr.rel (%p489) target = $region60
      $region59: #{tpu_custom_call.1} parent=5 // pred_region
        %s492 = ssub.s32 %s18, 2
        // Predicated region
        $region61: #{tpu_custom_call.1} parent=59 // pred_check
          %p493 = pneg %p169
        $region62: #{tpu_custom_call.1} parent=59 // pred_check_branch
          %495 = sbr.rel (%p493) target = $region64
        $region63: #{tpu_custom_call.1} parent=59 // pred_region
          %s496 = sand.u32 %s154, 1
          %s497 = scalar_lea.sflag [#allocation4], %s496
          %s498 = sand.u32 %s154, 1
          %s499 = smul.addr %s498, 8
          %s500 = scalar_lea.vmem [#allocation8], %s499
          %501 = dma.done %s497, 128
        $region64: #{tpu_custom_call.1} parent=59 // pred_fallthru
          _
      $region60: #{tpu_custom_call.1} parent=5 // pred_fallthru
        _
    $region6: #{tpu_custom_call.1} parent=1 // loop_footer
      %s22 = sadd.s32 1, %s18
    $region7: #{tpu_custom_call.1} parent=1 // loop_footer_branch
      %17 = sbr.rel target = $region3
    $region8: #{tpu_custom_call.1} parent=1 // loop_exit
      _
    %502 = vsyncpa [#allocation3], 1
    %s503 = scalar_lea.sflag [#allocation3], 1
    %504 = vsyncpa %s503, 1
    %505 = vsyncpa [#allocation6], 1
    %506 = vsyncpa [#allocation4], 1
    %s507 = scalar_lea.sflag [#allocation4], 1
    %508 = vsyncpa %s507, 1

</llo_original>
